<compile_context>
chip_gen: v7x
topology: tpu7x:2x2x1
jax: 0.10.0
libtpu: 0.0.40
codegen_flags: <defaults>
</compile_context>

<pallas_src>
import jax
import jax.numpy as jnp
from jax.experimental import pallas as pl
from jax.experimental.pallas import tpu as pltpu

NEG_INF = -1e30     # padded-class logit bias (finite, so 0 * logit stays 0, not NaN)
C_PAD = 128         # lane-dense class dimension
MAX_TB = 1024       # batch-tile cap (rows per grid step)


def classifier_kernel(xs_ref, w1_ref, b1_ref, w2_ref, b2_ref, wp_ref, bp_ref,
                      y_ref, wt_ref, probs_ref, parts_ref):
    # decoder FeedForward: Linear -> ReLU -> Linear -> ReLU
    # torch.cat([mix_s, structured], -1) @ W1 is a single merged matmul (xs = x || s).
    h1 = jnp.dot(xs_ref[...], w1_ref[...],
                 preferred_element_type=jnp.float32) + b1_ref[...]
    h1 = jnp.maximum(h1, 0.0)

    h2 = jnp.dot(h1.astype(w2_ref.dtype), w2_ref[...],
                 preferred_element_type=jnp.float32) + b2_ref[...]
    h2 = jnp.maximum(h2, 0.0)

    # predictor: Linear (C padded to 128 lanes) -> softmax + weighted CE partials.
    logits = jnp.dot(h2.astype(wp_ref.dtype), wp_ref[...],
                     preferred_element_type=jnp.float32) + bp_ref[...]
    m = jnp.max(logits, axis=-1, keepdims=True)
    shifted = logits - m
    e = jnp.exp(shifted)                       # padded lanes underflow to exactly 0
    denom = jnp.sum(e, axis=-1, keepdims=True)
    probs_ref[...] = (e * pl.reciprocal(denom, approx=True)).astype(probs_ref.dtype)

    # Exact log-softmax for the loss; label one-hot built in-kernel from int32 labels.
    logp = shifted - jnp.log(denom)
    lane = jax.lax.broadcasted_iota(jnp.int32, logp.shape, 1)     # (TB, C_PAD)
    sel = jnp.where(lane == y_ref[...], logp, 0.0)                # logp at the target class
    w = wt_ref[...]                                               # (TB, 1); padded rows = 0
    num = -jnp.sum(w * sel)                                       # sum_b w_b * nll_b
    den = jnp.sum(w)                                              # sum_b w_b

    # Per-tile partials packed into a full, unmasked (1, 8, 128) tile:
    # lane 0 = numerator, lane 1 = denominator. Wrapper reduces + divides.
    lane8 = jax.lax.broadcasted_iota(jnp.int32, parts_ref.shape, 2)
    parts_ref[...] = jnp.where(lane8 == 0, num, jnp.where(lane8 == 1, den, 0.0))


def _pick_batch_tile(batch, cap=MAX_TB):
    """Rows per grid step (multiple of 8) and number of grid steps."""
    rows = ((batch + 7) // 8) * 8
    if rows <= cap:
        return rows, 1          # single step: best on 1-TC v5e/v6e and for tiny B
    nt = pl.cdiv(rows, cap)
    if nt % 2:                  # even nt -> both v7x TensorCores get tiles under "parallel"
        nt += 1
    tb = ((pl.cdiv(rows, nt) + 7) // 8) * 8
    return tb, pl.cdiv(rows, tb)


def hier_classifier_head_forward(x, structured_data, labels, weight, params):
    """Fused decoder+predictor head. Returns predict / probs / loss like the torch module."""
    B, Dx = x.shape
    Ds = structured_data.shape[1]
    H1 = params["w1a"].shape[1]
    H2 = params["w2"].shape[1]
    C = params["wp"].shape[1]
    assert C <= C_PAD, f"num_classes={C} exceeds lane-dense class pad {C_PAD}"

    K = Dx + Ds
    K_pad = ((K + 63) // 64) * 64
    H1_pad = ((H1 + 127) // 128) * 128
    H2_pad = ((H2 + 127) // 128) * 128

    # Weights: bf16 MXU operands, zero-padded hidden dims (bias pad = 0 -> ReLU keeps 0).
    w1 = jnp.zeros((K_pad, H1_pad), jnp.bfloat16)
    w1 = w1.at[:Dx, :H1].set(params["w1a"].astype(jnp.bfloat16))
    w1 = w1.at[Dx:K, :H1].set(params["w1b"].astype(jnp.bfloat16))
    b1 = jnp.zeros((1, H1_pad), jnp.float32).at[:, :H1].set(params["b1"].astype(jnp.float32))
    w2 = jnp.zeros((H1_pad, H2_pad), jnp.bfloat16).at[:H1, :H2].set(params["w2"].astype(jnp.bfloat16))
    b2 = jnp.zeros((1, H2_pad), jnp.float32).at[:, :H2].set(params["b2"].astype(jnp.float32))
    # Class dim: pad weights with 0, bias with NEG_INF so padded logits behave like -inf.
    wp = jnp.zeros((H2_pad, C_PAD), jnp.bfloat16).at[:H2, :C].set(params["wp"].astype(jnp.bfloat16))
    bp = jnp.full((1, C_PAD), NEG_INF, jnp.float32).at[:, :C].set(params["bp"].astype(jnp.float32))

    # Batch tiling: adaptive TB (multiple of 8); pad batch with zero rows / zero weights.
    TB, nt = _pick_batch_tile(B)
    B_pad = nt * TB
    pad_b = B_pad - B

    xs = jnp.concatenate([x.astype(jnp.bfloat16),
                          structured_data.astype(jnp.bfloat16)], axis=-1)
    xs = jnp.pad(xs, ((0, pad_b), (0, K_pad - K)))
    y_p = jnp.pad(labels.astype(jnp.int32).reshape(B, 1), ((0, pad_b), (0, 0)))
    wt_p = jnp.pad(weight.astype(jnp.float32), ((0, pad_b), (0, 0)))

    flops = 2 * B_pad * (K_pad * H1_pad + H1_pad * H2_pad + H2_pad * C_PAD)
    transcendentals = B_pad * (C_PAD + 2)  # exp per class + log + rcp per row
    bytes_accessed = (xs.size * 2 + w1.size * 2 + b1.size * 4 + w2.size * 2 + b2.size * 4
                      + wp.size * 2 + bp.size * 4 + y_p.size * 4 + wt_p.size * 4
                      + B_pad * C_PAD * 2 + nt * 8 * C_PAD * 4)

    def const(shape):  # weights: constant block index -> stay VMEM-resident across tiles
        return pl.BlockSpec(shape, lambda i: tuple(0 for _ in shape))

    probs_p, parts = pl.pallas_call(
        classifier_kernel,
        out_shape=(
            jax.ShapeDtypeStruct((B_pad, C_PAD), jnp.bfloat16),
            jax.ShapeDtypeStruct((nt, 8, C_PAD), jnp.float32),
        ),
        grid_spec=pltpu.PrefetchScalarGridSpec(
            num_scalar_prefetch=0,
            grid=(nt,),
            in_specs=[
                pl.BlockSpec((TB, K_pad), lambda i: (i, 0)),
                const((K_pad, H1_pad)), const((1, H1_pad)),
                const((H1_pad, H2_pad)), const((1, H2_pad)),
                const((H2_pad, C_PAD)), const((1, C_PAD)),
                pl.BlockSpec((TB, 1), lambda i: (i, 0)),
                pl.BlockSpec((TB, 1), lambda i: (i, 0)),
            ],
            out_specs=[
                pl.BlockSpec((TB, C_PAD), lambda i: (i, 0)),
                pl.BlockSpec((1, 8, C_PAD), lambda i: (i, 0, 0)),
            ],
        ),
        compiler_params=pltpu.CompilerParams(
            dimension_semantics=("parallel",),
        ),
        cost_estimate=pl.CostEstimate(flops=flops,
                                      transcendentals=transcendentals,
                                      bytes_accessed=bytes_accessed),
    )(xs, w1, b1, w2, b2, wp, bp, y_p, wt_p)

    probs = probs_p[:B, :C].astype(jnp.float32)
    loss = jnp.sum(parts[:, 0, 0]) / jnp.sum(parts[:, 0, 1])
    predict = jnp.argmax(probs, axis=-1)
    return {"predict": predict, "probs": probs, "loss": loss}


def init_params(key, input_dim, structured_dim, hidden1, hidden2, num_classes):
    # decoder input_dim = sentence_encoder.output_size + structured_dim (use_structured=True);
    # the first Linear's weight is stored pre-split into the x-rows / structured-rows halves.
    k1, k2, k3, k4, k5, k6, k7 = jax.random.split(key, 7)
    scale = 0.1
    return {
        "w1a": scale * jax.random.normal(k1, (input_dim, hidden1), jnp.float32),
        "w1b": scale * jax.random.normal(k4, (structured_dim, hidden1), jnp.float32),
        "b1": 0.05 * jax.random.normal(k5, (1, hidden1), jnp.float32),
        "w2": scale * jax.random.normal(k2, (hidden1, hidden2), jnp.float32),
        "b2": 0.05 * jax.random.normal(k6, (1, hidden2), jnp.float32),
        "wp": scale * jax.random.normal(k3, (hidden2, num_classes), jnp.float32),
        "bp": 0.05 * jax.random.normal(k7, (1, num_classes), jnp.float32),
    }


if __name__ == "__main__":
    B = 32             # documents in the batch
    INPUT_DIM = 32     # sentence_encoder output size (mix_s features)
    STRUCT_DIM = 16    # structured_data dim
    H1, H2 = 64, 64    # decoder FeedForward hidden dims
    C = 8              # predictor num classes

    key = jax.random.PRNGKey(0)
    kx, ks, ky, kw, kp = jax.random.split(key, 5)

    x = jax.random.normal(kx, (B, INPUT_DIM), jnp.float32)                  # pooled mix_s
    structured_data = jax.random.normal(ks, (B, STRUCT_DIM), jnp.float32)   # batch.structured_data
    y = jax.random.randint(ky, (B,), 0, C)                                  # batch.y (class ids)
    weight = jax.random.uniform(kw, (B, 1), jnp.float32, 0.5, 1.5)          # batch.weight

    params = init_params(kp, INPUT_DIM, STRUCT_DIM, H1, H2, C)

    outputs = hier_classifier_head_forward(x, structured_data, y, weight, params)
    jax.block_until_ready(outputs)

    # Reference in plain JAX (same bf16 matmul operands, f32 accumulation).
    xs_ref = jnp.concatenate([x, structured_data], axis=-1).astype(jnp.bfloat16)
    w1_ref = jnp.concatenate([params["w1a"], params["w1b"]], axis=0).astype(jnp.bfloat16)
    h1 = jax.nn.relu(
        jnp.dot(xs_ref, w1_ref, preferred_element_type=jnp.float32) + params["b1"])
    h2 = jax.nn.relu(
        jnp.dot(h1.astype(jnp.bfloat16), params["w2"].astype(jnp.bfloat16),
                preferred_element_type=jnp.float32) + params["b2"])
    logits = jnp.dot(h2.astype(jnp.bfloat16), params["wp"].astype(jnp.bfloat16),
                     preferred_element_type=jnp.float32) + params["bp"]
    ref_probs = jax.nn.softmax(logits, axis=-1)
    ref_logp = jax.nn.log_softmax(logits, axis=-1)
    ref_nll = -ref_logp[jnp.arange(B), y][:, None]
    ref_loss = jnp.sum(weight * ref_nll) / jnp.sum(weight)

    assert outputs["probs"].shape == (B, C)
    assert jnp.allclose(outputs["probs"], ref_probs, atol=4e-3, rtol=4e-3), "probs mismatch"
    assert jnp.allclose(outputs["loss"], ref_loss, atol=2e-4, rtol=2e-4), "loss mismatch"

    print("KERNEL_OK")
</pallas_src>

<mosaic_0001>
module attributes {stable_mosaic.version = 11 : i64} {
  func.func @classifier_kernel(%arg0: i32, %arg1: memref<32x64xbf16, #tpu.memory_space<vmem>>, %arg2: memref<64x128xbf16, #tpu.memory_space<vmem>>, %arg3: memref<1x128xf32, #tpu.memory_space<vmem>>, %arg4: memref<128x128xbf16, #tpu.memory_space<vmem>>, %arg5: memref<1x128xf32, #tpu.memory_space<vmem>>, %arg6: memref<128x128xbf16, #tpu.memory_space<vmem>>, %arg7: memref<1x128xf32, #tpu.memory_space<vmem>>, %arg8: memref<32x1xi32, #tpu.memory_space<vmem>>, %arg9: memref<32x1xf32, #tpu.memory_space<vmem>>, %arg10: memref<32x128xbf16, #tpu.memory_space<vmem>>, %arg11: memref<1x8x128xf32, #tpu.memory_space<vmem>>) attributes {dimension_semantics = [#tpu.dimension_semantics<parallel>], iteration_bounds = array<i64: 1>, scalar_prefetch = 0 : i64, scratch_operands = 0 : i64, tpu.core_type = #tpu.core_type<tc>, window_params = [{transform_indices = @transform_0, window_bounds = array<i64: 32, 64>}, {pipeline_mode = #tpu.pipeline_mode<synchronous>, transform_indices = @transform_1, window_bounds = array<i64: 64, 128>}, {pipeline_mode = #tpu.pipeline_mode<synchronous>, transform_indices = @transform_2, window_bounds = array<i64: 1, 128>}, {pipeline_mode = #tpu.pipeline_mode<synchronous>, transform_indices = @transform_3, window_bounds = array<i64: 128, 128>}, {pipeline_mode = #tpu.pipeline_mode<synchronous>, transform_indices = @transform_4, window_bounds = array<i64: 1, 128>}, {pipeline_mode = #tpu.pipeline_mode<synchronous>, transform_indices = @transform_5, window_bounds = array<i64: 128, 128>}, {pipeline_mode = #tpu.pipeline_mode<synchronous>, transform_indices = @transform_6, window_bounds = array<i64: 1, 128>}, {transform_indices = @transform_7, window_bounds = array<i64: 32, 1>}, {transform_indices = @transform_8, window_bounds = array<i64: 32, 1>}, {transform_indices = @transform_9, window_bounds = array<i64: 32, 128>}, {transform_indices = @transform_10, window_bounds = array<i64: 1, 8, 128>}]} {
    %c0 = arith.constant 0 : index
    %c0_0 = arith.constant 0 : index
    %0 = vector.load %arg1[%c0, %c0_0] : memref<32x64xbf16, #tpu.memory_space<vmem>>, vector<32x64xbf16>
    %c0_1 = arith.constant 0 : index
    %c0_2 = arith.constant 0 : index
    %1 = vector.load %arg2[%c0_1, %c0_2] : memref<64x128xbf16, #tpu.memory_space<vmem>>, vector<64x128xbf16>
    %cst = arith.constant dense<0.000000e+00> : vector<32x128xf32>
    %2 = tpu.matmul %0, %1, %cst {dimension_numbers = #tpu.dot_dimension_numbers<[1], [0], [0], [1], [0, 0, 1, 1], [], []>} : vector<32x64xbf16>, vector<64x128xbf16>, vector<32x128xf32> -> vector<32x128xf32>
    %c0_3 = arith.constant 0 : index
    %c0_4 = arith.constant 0 : index
    %3 = vector.load %arg3[%c0_3, %c0_4] : memref<1x128xf32, #tpu.memory_space<vmem>>, vector<1x128xf32>
    %4 = vector.broadcast %3 : vector<1x128xf32> to vector<32x128xf32>
    %5 = arith.addf %2, %4 : vector<32x128xf32>
    %cst_5 = arith.constant 0.000000e+00 : f32
    %6 = vector.broadcast %cst_5 : f32 to vector<32x128xf32>
    %7 = arith.maximumf %5, %6 : vector<32x128xf32>
    %8 = arith.truncf %7 : vector<32x128xf32> to vector<32x128xbf16>
    %c0_6 = arith.constant 0 : index
    %c0_7 = arith.constant 0 : index
    %9 = vector.load %arg4[%c0_6, %c0_7] : memref<128x128xbf16, #tpu.memory_space<vmem>>, vector<128x128xbf16>
    %cst_8 = arith.constant dense<0.000000e+00> : vector<32x128xf32>
    %10 = tpu.matmul %8, %9, %cst_8 {dimension_numbers = #tpu.dot_dimension_numbers<[1], [0], [0], [1], [0, 0, 1, 1], [], []>} : vector<32x128xbf16>, vector<128x128xbf16>, vector<32x128xf32> -> vector<32x128xf32>
    %c0_9 = arith.constant 0 : index
    %c0_10 = arith.constant 0 : index
    %11 = vector.load %arg5[%c0_9, %c0_10] : memref<1x128xf32, #tpu.memory_space<vmem>>, vector<1x128xf32>
    %12 = vector.broadcast %11 : vector<1x128xf32> to vector<32x128xf32>
    %13 = arith.addf %10, %12 : vector<32x128xf32>
    %cst_11 = arith.constant 0.000000e+00 : f32
    %14 = vector.broadcast %cst_11 : f32 to vector<32x128xf32>
    %15 = arith.maximumf %13, %14 : vector<32x128xf32>
    %16 = arith.truncf %15 : vector<32x128xf32> to vector<32x128xbf16>
    %c0_12 = arith.constant 0 : index
    %c0_13 = arith.constant 0 : index
    %17 = vector.load %arg6[%c0_12, %c0_13] : memref<128x128xbf16, #tpu.memory_space<vmem>>, vector<128x128xbf16>
    %cst_14 = arith.constant dense<0.000000e+00> : vector<32x128xf32>
    %18 = tpu.matmul %16, %17, %cst_14 {dimension_numbers = #tpu.dot_dimension_numbers<[1], [0], [0], [1], [0, 0, 1, 1], [], []>} : vector<32x128xbf16>, vector<128x128xbf16>, vector<32x128xf32> -> vector<32x128xf32>
    %c0_15 = arith.constant 0 : index
    %c0_16 = arith.constant 0 : index
    %19 = vector.load %arg7[%c0_15, %c0_16] : memref<1x128xf32, #tpu.memory_space<vmem>>, vector<1x128xf32>
    %20 = vector.broadcast %19 : vector<1x128xf32> to vector<32x128xf32>
    %21 = arith.addf %18, %20 : vector<32x128xf32>
    %cst_17 = arith.constant dense<0xFF800000> : vector<32xf32>
    %22 = vector.multi_reduction <maximumf>, %21, %cst_17 [1] : vector<32x128xf32> to vector<32xf32>
    %23 = vector.shape_cast %22 : vector<32xf32> to vector<32x1xf32>
    %24 = vector.broadcast %23 : vector<32x1xf32> to vector<32x128xf32>
    %25 = arith.subf %21, %24 : vector<32x128xf32>
    %26 = math.exp %25 : vector<32x128xf32>
    %cst_18 = arith.constant dense<0.000000e+00> : vector<32xf32>
    %27 = vector.multi_reduction <add>, %26, %cst_18 [1] : vector<32x128xf32> to vector<32xf32>
    %28 = vector.shape_cast %27 : vector<32xf32> to vector<32x1xf32>
    %29 = tpu.reciprocal %28 {approx = true} : vector<32x1xf32> -> vector<32x1xf32>
    %30 = vector.broadcast %29 : vector<32x1xf32> to vector<32x128xf32>
    %31 = arith.mulf %26, %30 : vector<32x128xf32>
    %32 = arith.truncf %31 : vector<32x128xf32> to vector<32x128xbf16>
    %c0_19 = arith.constant 0 : index
    %c0_20 = arith.constant 0 : index
    %33 = vector.load %arg10[%c0_19, %c0_20] : memref<32x128xbf16, #tpu.memory_space<vmem>>, vector<32x128xbf16>
    tpu.vector_store %arg10[%c0_19, %c0_20], %32 {strides = array<i32>} : memref<32x128xbf16, #tpu.memory_space<vmem>>, vector<32x128xbf16>,
    %34 = math.log %28 : vector<32x1xf32>
    %35 = vector.broadcast %34 : vector<32x1xf32> to vector<32x128xf32>
    %36 = arith.subf %25, %35 : vector<32x128xf32>
    %37 = tpu.iota {dimensions = array<i32: 1>} : vector<32x128xi32>
    %c0_21 = arith.constant 0 : index
    %c0_22 = arith.constant 0 : index
    %38 = vector.load %arg8[%c0_21, %c0_22] : memref<32x1xi32, #tpu.memory_space<vmem>>, vector<32x1xi32>
    %39 = vector.broadcast %38 : vector<32x1xi32> to vector<32x128xi32>
    %40 = arith.cmpi eq, %37, %39 : vector<32x128xi32>
    %cst_23 = arith.constant 0.000000e+00 : f32
    %41 = vector.broadcast %cst_23 : f32 to vector<32x128xf32>
    %42 = arith.select %40, %36, %41 : vector<32x128xi1>, vector<32x128xf32>
    %c0_24 = arith.constant 0 : index
    %c0_25 = arith.constant 0 : index
    %43 = vector.load %arg9[%c0_24, %c0_25] : memref<32x1xf32, #tpu.memory_space<vmem>>, vector<32x1xf32>
    %44 = vector.broadcast %43 : vector<32x1xf32> to vector<32x128xf32>
    %45 = arith.mulf %44, %42 : vector<32x128xf32>
    %46 = vector.shape_cast %45 : vector<32x128xf32> to vector<1x32x128xf32>
    %cst_26 = arith.constant dense<0.000000e+00> : vector<1xf32>
    %47 = vector.multi_reduction <add>, %46, %cst_26 [1, 2] : vector<1x32x128xf32> to vector<1xf32>
    %48 = vector.shape_cast %47 : vector<1xf32> to vector<1x1x1xf32>
    %49 = vector.extract %48[0, 0, 0] : f32 from vector<1x1x1xf32>
    %cst_27 = arith.constant 0.000000e+00 : f32
    %50 = arith.subf %cst_27, %49 : f32
    %51 = vector.shape_cast %43 : vector<32x1xf32> to vector<1x32x1xf32>
    %cst_28 = arith.constant dense<0.000000e+00> : vector<1xf32>
    %52 = vector.multi_reduction <add>, %51, %cst_28 [1, 2] : vector<1x32x1xf32> to vector<1xf32>
    %53 = vector.shape_cast %52 : vector<1xf32> to vector<1x1x1xf32>
    %54 = vector.extract %53[0, 0, 0] : f32 from vector<1x1x1xf32>
    %55 = tpu.iota {dimensions = array<i32: 2>} : vector<1x8x128xi32>
    %c0_i32 = arith.constant 0 : i32
    %56 = vector.broadcast %c0_i32 : i32 to vector<1x8x128xi32>
    %57 = arith.cmpi eq, %55, %56 : vector<1x8x128xi32>
    %c1_i32 = arith.constant 1 : i32
    %58 = vector.broadcast %c1_i32 : i32 to vector<1x8x128xi32>
    %59 = arith.cmpi eq, %55, %58 : vector<1x8x128xi32>
    %cst_29 = arith.constant 0.000000e+00 : f32
    %60 = vector.broadcast %54 : f32 to vector<1x8x128xf32>
    %61 = vector.broadcast %cst_29 : f32 to vector<1x8x128xf32>
    %62 = arith.select %59, %60, %61 : vector<1x8x128xi1>, vector<1x8x128xf32>
    %63 = vector.broadcast %50 : f32 to vector<1x8x128xf32>
    %64 = arith.select %57, %63, %62 : vector<1x8x128xi1>, vector<1x8x128xf32>
    %c0_30 = arith.constant 0 : index
    %c0_31 = arith.constant 0 : index
    %c0_32 = arith.constant 0 : index
    %65 = vector.load %arg11[%c0_30, %c0_31, %c0_32] : memref<1x8x128xf32, #tpu.memory_space<vmem>>, vector<1x8x128xf32>
    tpu.vector_store %arg11[%c0_30, %c0_31, %c0_32], %64 {strides = array<i32>} : memref<1x8x128xf32, #tpu.memory_space<vmem>>, vector<1x8x128xf32>,
    return
  }
  func.func @transform_0(%arg0: i32) -> (i32, i32) {
    %c0_i32 = arith.constant 0 : i32
    %c0_i32_0 = arith.constant 0 : i32
    return %arg0, %c0_i32 : i32, i32
  }
  func.func @transform_1(%arg0: i32) -> (i32, i32) {
    %c0_i32 = arith.constant 0 : i32
    %c0_i32_0 = arith.constant 0 : i32
    %c0_i32_1 = arith.constant 0 : i32
    return %c0_i32, %c0_i32_0 : i32, i32
  }
  func.func @transform_2(%arg0: i32) -> (i32, i32) {
    %c0_i32 = arith.constant 0 : i32
    %c0_i32_0 = arith.constant 0 : i32
    %c0_i32_1 = arith.constant 0 : i32
    return %c0_i32, %c0_i32_0 : i32, i32
  }
  func.func @transform_3(%arg0: i32) -> (i32, i32) {
    %c0_i32 = arith.constant 0 : i32
    %c0_i32_0 = arith.constant 0 : i32
    %c0_i32_1 = arith.constant 0 : i32
    return %c0_i32, %c0_i32_0 : i32, i32
  }
  func.func @transform_4(%arg0: i32) -> (i32, i32) {
    %c0_i32 = arith.constant 0 : i32
    %c0_i32_0 = arith.constant 0 : i32
    %c0_i32_1 = arith.constant 0 : i32
    return %c0_i32, %c0_i32_0 : i32, i32
  }
  func.func @transform_5(%arg0: i32) -> (i32, i32) {
    %c0_i32 = arith.constant 0 : i32
    %c0_i32_0 = arith.constant 0 : i32
    %c0_i32_1 = arith.constant 0 : i32
    return %c0_i32, %c0_i32_0 : i32, i32
  }
  func.func @transform_6(%arg0: i32) -> (i32, i32) {
    %c0_i32 = arith.constant 0 : i32
    %c0_i32_0 = arith.constant 0 : i32
    %c0_i32_1 = arith.constant 0 : i32
    return %c0_i32, %c0_i32_0 : i32, i32
  }
  func.func @transform_7(%arg0: i32) -> (i32, i32) {
    %c0_i32 = arith.constant 0 : i32
    %c0_i32_0 = arith.constant 0 : i32
    return %arg0, %c0_i32 : i32, i32
  }
  func.func @transform_8(%arg0: i32) -> (i32, i32) {
    %c0_i32 = arith.constant 0 : i32
    %c0_i32_0 = arith.constant 0 : i32
    return %arg0, %c0_i32 : i32, i32
  }
  func.func @transform_9(%arg0: i32) -> (i32, i32) {
    %c0_i32 = arith.constant 0 : i32
    %c0_i32_0 = arith.constant 0 : i32
    return %arg0, %c0_i32 : i32, i32
  }
  func.func @transform_10(%arg0: i32) -> (i32, i32, i32) {
    %c0_i32 = arith.constant 0 : i32
    %c0_i32_0 = arith.constant 0 : i32
    %c0_i32_1 = arith.constant 0 : i32
    return %arg0, %c0_i32, %c0_i32_0 : i32, i32, i32
  }
}

</mosaic_0001>

<llo_original>
// kernel: tpu_custom_call.1
$region0: #{tpu_custom_call.1}
  #allocation0 [shape = 'u32[]', space=smem, size = 0x4, offset = 0x4, fixed_abs, tag = 'smem constant byte address 0x4 - core index']
  #allocation1 [shape = 'u32[144,128]{1,0:T(1,128)}', space=vmem, size = 0x12000, scoped, tag = 'internal scratch']
  %s0 = inlined_call_operand.hbm [shape: bf16[32,64], index: 0, kind: input, shape index: {}]
  %s1 = inlined_call_operand.hbm [shape: bf16[64,128], index: 1, kind: input, shape index: {}]
  %s2 = inlined_call_operand.vmem [shape: f32[1,128], index: 2, kind: input, shape index: {}]
  %s3 = inlined_call_operand.vmem [shape: bf16[128,128], index: 3, kind: input, shape index: {}]
  %s4 = inlined_call_operand.vmem [shape: f32[1,128], index: 4, kind: input, shape index: {}]
  %s5 = inlined_call_operand.hbm [shape: bf16[128,128], index: 5, kind: input, shape index: {}]
  %s6 = inlined_call_operand.vmem [shape: f32[1,128], index: 6, kind: input, shape index: {}]
  %s7 = inlined_call_operand.vmem [shape: s32[32,1], index: 7, kind: input, shape index: {}]
  %s8 = inlined_call_operand.vmem [shape: f32[32,1], index: 8, kind: input, shape index: {}]
  %s9 = inlined_call_operand.hbm [shape: bf16[32,128], index: 9, kind: output, shape index: {0}]
  %s10 = inlined_call_operand.hbm [shape: f32[1,8,128], index: 10, kind: output, shape index: {1}]
  %11 = xla_tuple %s9, %s10
  %s12 = sld [smem:[#allocation0]]
  $region66: #{tpu_custom_call.1} parent=0
    _
  %s14 = ssub.s32 1, %s12
  %s15 = scalar_select 0, %s14, %s12
  $region1: #{tpu_custom_call.1} parent=0
    #allocation2 [shape = 'u8[8192]{0}', space=vmem, size = 0x2000, scoped, tag = 'input window, operand 0, single buffered']
    #allocation3 [shape = 's32[1]{0}', space=sflag, size = 0x4, scoped, tag = 'scoped memory for tpu_custom_call.1']
    #allocation4 [shape = 's32[1]{0}', space=sflag, size = 0x4, scoped, tag = 'scoped memory for tpu_custom_call.1']
    #allocation5 [shape = 'u8[16384]{0}', space=vmem, size = 0x4000, scoped, tag = 'input window, operand 1, single buffered']
    #allocation6 [shape = 's32[1]{0}', space=sflag, size = 0x4, scoped, tag = 'scoped memory for tpu_custom_call.1']
    #allocation7 [shape = 'u8[32768]{0}', space=vmem, size = 0x8000, scoped, tag = 'input window, operand 5, single buffered']
    #allocation8 [shape = 'u8[8192]{0}', space=vmem, size = 0x2000, scoped, tag = 'output window, operand 0, single buffered']
    #allocation9 [shape = 'u8[4096]{0}', space=vmem, size = 0x1000, scoped, tag = 'output window, operand 1, single buffered']
    #allocation10 [shape = 's32[1]{0}', space=sflag, size = 0x4, scoped, tag = 'scoped memory for tpu_custom_call.1']
    %16 = vsyncpa [#allocation3], 0
    %17 = vsyncpa [#allocation6], 0
    %18 = vsyncpa [#allocation4], 0
    %19 = vsyncpa [#allocation10], 0
    // Predicated region
    $region2: #{tpu_custom_call.1} parent=1 // pred_check
      _
    $region3: #{tpu_custom_call.1} parent=1 // pred_check_branch
      %21 = sbr.rel (0) target = $region5
    $region4: #{tpu_custom_call.1} parent=1 // pred_region
      %s23 = ssub.s32 256, 256
      %24 = vsyncadd [#allocation3], %s23
      %s25 = sshll.u32 [#allocation2], 4
      %s26 = int_to_ptr.vmem [resolvable:$true] %s25
      %31 = dma.hbm_to_vmem [thread:$0]  %s0, 256, %s26, [#allocation3], 64, 64, 4
    $region5: #{tpu_custom_call.1} parent=1 // pred_fallthru
      _
    // Predicated region
    $region6: #{tpu_custom_call.1} parent=1 // pred_check
      _
    $region7: #{tpu_custom_call.1} parent=1 // pred_check_branch
      %33 = sbr.rel (0) target = $region9
    $region8: #{tpu_custom_call.1} parent=1 // pred_region
      %s35 = ssub.s32 512, 512
      %36 = vsyncadd [#allocation6], %s35
      %s37 = sshll.u32 [#allocation5], 4
      %s38 = int_to_ptr.vmem [resolvable:$true] %s37
      %43 = dma.hbm_to_vmem [thread:$0]  %s1, 512, %s38, [#allocation6], 64, 64, 4
    $region9: #{tpu_custom_call.1} parent=1 // pred_fallthru
      _
    // Predicated region
    $region10: #{tpu_custom_call.1} parent=1 // pred_check
      _
    $region11: #{tpu_custom_call.1} parent=1 // pred_check_branch
      %45 = sbr.rel (0) target = $region13
    $region12: #{tpu_custom_call.1} parent=1 // pred_region
      _
    $region13: #{tpu_custom_call.1} parent=1 // pred_fallthru
      _
    // Predicated region
    $region14: #{tpu_custom_call.1} parent=1 // pred_check
      _
    $region15: #{tpu_custom_call.1} parent=1 // pred_check_branch
      %47 = sbr.rel (0) target = $region17
    $region16: #{tpu_custom_call.1} parent=1 // pred_region
      _
    $region17: #{tpu_custom_call.1} parent=1 // pred_fallthru
      _
    // Predicated region
    $region18: #{tpu_custom_call.1} parent=1 // pred_check
      _
    $region19: #{tpu_custom_call.1} parent=1 // pred_check_branch
      %49 = sbr.rel (0) target = $region21
    $region20: #{tpu_custom_call.1} parent=1 // pred_region
      _
    $region21: #{tpu_custom_call.1} parent=1 // pred_fallthru
      _
    // Predicated region
    $region22: #{tpu_custom_call.1} parent=1 // pred_check
      _
    $region23: #{tpu_custom_call.1} parent=1 // pred_check_branch
      %51 = sbr.rel (0) target = $region25
    $region24: #{tpu_custom_call.1} parent=1 // pred_region
      %s53 = ssub.s32 1024, 1024
      %54 = vsyncadd [#allocation6], %s53
      %s55 = sshll.u32 [#allocation7], 4
      %s56 = int_to_ptr.vmem [resolvable:$true] %s55
      %61 = dma.hbm_to_vmem [thread:$0]  %s5, 1024, %s56, [#allocation6], 64, 64, 4
    $region25: #{tpu_custom_call.1} parent=1 // pred_fallthru
      _
    // Predicated region
    $region26: #{tpu_custom_call.1} parent=1 // pred_check
      _
    $region27: #{tpu_custom_call.1} parent=1 // pred_check_branch
      %63 = sbr.rel (0) target = $region29
    $region28: #{tpu_custom_call.1} parent=1 // pred_region
      _
    $region29: #{tpu_custom_call.1} parent=1 // pred_fallthru
      _
    // Predicated region
    $region30: #{tpu_custom_call.1} parent=1 // pred_check
      _
    $region31: #{tpu_custom_call.1} parent=1 // pred_check_branch
      %65 = sbr.rel (0) target = $region33
    $region32: #{tpu_custom_call.1} parent=1 // pred_region
      _
    $region33: #{tpu_custom_call.1} parent=1 // pred_fallthru
      _
    // Predicated region
    $region34: #{tpu_custom_call.1} parent=1 // pred_check
      _
    $region35: #{tpu_custom_call.1} parent=1 // pred_check_branch
      %67 = sbr.rel (0) target = $region37
    $region36: #{tpu_custom_call.1} parent=1 // pred_region
      _
    $region37: #{tpu_custom_call.1} parent=1 // pred_fallthru
      _
    // Predicated region
    $region38: #{tpu_custom_call.1} parent=1 // pred_check
      _
    $region39: #{tpu_custom_call.1} parent=1 // pred_check_branch
      %69 = sbr.rel (0) target = $region41
    $region40: #{tpu_custom_call.1} parent=1 // pred_region
      %70 = dma.done [#allocation3], 256
    $region41: #{tpu_custom_call.1} parent=1 // pred_fallthru
      _
    // Predicated region
    $region42: #{tpu_custom_call.1} parent=1 // pred_check
      _
    $region43: #{tpu_custom_call.1} parent=1 // pred_check_branch
      %72 = sbr.rel (0) target = $region45
    $region44: #{tpu_custom_call.1} parent=1 // pred_region
      %73 = dma.done [#allocation6], 512
    $region45: #{tpu_custom_call.1} parent=1 // pred_fallthru
      _
    // Predicated region
    $region46: #{tpu_custom_call.1} parent=1 // pred_check
      _
    $region47: #{tpu_custom_call.1} parent=1 // pred_check_branch
      %75 = sbr.rel (0) target = $region49
    $region48: #{tpu_custom_call.1} parent=1 // pred_region
      %76 = dma.done [#allocation6], 1024
    $region49: #{tpu_custom_call.1} parent=1 // pred_fallthru
      _
    %v78 = vld [vmem:[#allocation2] sm:$0xf]
    %v79 = vld [vmem:[#allocation2 + $0x4] sm:$0xf]
    %v80 = vld [vmem:[#allocation2 + $0x8] sm:$0xf]
    %v81 = vld [vmem:[#allocation2 + $0xc] sm:$0xf]
    %v82 = vld [vmem:[#allocation5] sm:$0xf]
    %v83 = vld [vmem:[#allocation5 + $0x4] sm:$0xf]
    %v84 = vld [vmem:[#allocation5 + $0x8] sm:$0xf]
    %v85 = vld [vmem:[#allocation5 + $0xc] sm:$0xf]
    %v86 = vld [vmem:[#allocation5 + $0x10] sm:$0xf]
    %v87 = vld [vmem:[#allocation5 + $0x14] sm:$0xf]
    %v88 = vld [vmem:[#allocation5 + $0x18] sm:$0xf]
    %v89 = vld [vmem:[#allocation5 + $0x1c] sm:$0xf]
    %v90 = vld [vmem:[%s2] sm:$0x1]
    %v92 = vlaneseq
    %v93 = vshrl.u32 %v92, 7
    %v94 = vsub.s32 0, %v93
    %v95 = vrot.slane %v90, %v94
    %v101 = vunpack.c.l.b16 %v78
    %v102 = vunpack.c.l.b16 %v79
    %v103 = vunpack.c.l.b16 %v80
    %v104 = vunpack.c.l.b16 %v81
    %v105 = vpack.c.b16 %v102, %v101
    %v106 = vpack.c.b16 %v104, %v103
    %v115 = vunpack.c.l.b16 %v82
    %v116 = vunpack.c.l.b16 %v83
    %v117 = vunpack.c.l.b16 %v84
    %v118 = vunpack.c.l.b16 %v85
    %v119 = vunpack.c.l.b16 %v86
    %v120 = vunpack.c.l.b16 %v87
    %v121 = vunpack.c.l.b16 %v88
    %v122 = vunpack.c.l.b16 %v89
    %v123 = vpack.c.b16 %v116, %v115
    %v124 = vpack.c.b16 %v118, %v117
    %v125 = vpack.c.b16 %v120, %v119
    %v126 = vpack.c.b16 %v122, %v121
    %vm131 = vcmask 523264
    %v133 = vsel %vm131, %v105, 0
    %v136 = vsel %vm131, %v106, 0
    %138 = vmatprep.subr.bf16.mxu0 0
    %139 = vmatpush1.bf16.msra.mxu0 %v123
    %140 = vmatprep.subr.bf16.mxu0 0
    %141 = vmatpush1.bf16.msra.mxu0 %v124
    %142 = vmatprep.subr.bf16.mxu0 0
    %143 = vmatpush1.bf16.msra.mxu0 %v125
    %144 = vmatprep.subr.bf16.mxu0 0
    %145 = vmatpush1.bf16.msra.mxu0 %v126
    %146 = vmatprep.subr.bf16.mxu0 0
    %147 = vmatpush1.bf16.msra.mxu0 0
    %148 = vmatprep.subr.bf16.mxu0 0
    %149 = vmatpush1.bf16.msra.mxu0 0
    %150 = vmatprep.subr.bf16.mxu0 0
    %151 = vmatpush1.bf16.msra.mxu0 0
    %152 = vmatprep.subr.bf16.mxu0 0
    %153 = vmatpush1.bf16.msra.mxu0 0
    %154 = vmatprep.subr.bf16.mxu0 0
    %155 = vmatpush1.bf16.msra.mxu0 0
    %156 = vmatprep.subr.bf16.mxu0 0
    %157 = vmatpush1.bf16.msra.mxu0 0
    %158 = vmatprep.subr.bf16.mxu0 0
    %159 = vmatpush1.bf16.msra.mxu0 0
    %160 = vmatprep.subr.bf16.mxu0 0
    %161 = vmatpush1.bf16.msra.mxu0 0
    %162 = vmatprep.subr.bf16.mxu0 0
    %163 = vmatpush1.bf16.msra.mxu0 0
    %164 = vmatprep.subr.bf16.mxu0 0
    %165 = vmatpush1.bf16.msra.mxu0 0
    %166 = vmatprep.subr.bf16.mxu0 0
    %167 = vmatpush1.bf16.msra.mxu0 0
    %168 = vmatprep.subr.bf16.mxu0 0
    %169 = vmatpush1.bf16.msra.mxu0 0
    %170 = vmatprep.mubr.bf16.mxu0 0
    %171 = vmatmul.mubr.bf16.gmra.mrb[0].mxu0 %v133
    %v172 = vpop.f32.mrb[0].mxu0
    %v173 = vadd.f32 %v95, %v172
    %v174 = vpop.f32.mrb[0].mxu0
    %v175 = vpop.f32.mrb[0].mxu0
    %v176 = vadd.f32 %v95, %v175
    %v177 = vpop.f32.mrb[0].mxu0
    %178 = vmatprep.mubr.bf16.mxu0 0
    %179 = vmatmul.mubr.bf16.gmra.mrb[0].mxu0 %v136
    %v180 = vpop.f32.mrb[0].mxu0
    %v181 = vadd.f32 %v95, %v180
    %v182 = vpop.f32.mrb[0].mxu0
    %v183 = vpop.f32.mrb[0].mxu0
    %v184 = vadd.f32 %v95, %v183
    %v185 = vpop.f32.mrb[0].mxu0
    %186 = vdwg.mxu0
    %v187 = vmax.f32 %v173, 0.0
    %v188 = vmax.f32 %v176, 0.0
    %v189 = vmax.f32 %v181, 0.0
    %v190 = vmax.f32 %v184, 0.0
    %v191 = vpack.c.bf16 %v188, %v187
    %v192 = vpack.c.bf16 %v190, %v189
    %v193 = vld [vmem:[%s3] sm:$0xf]
    %v194 = vld [vmem:[%s3 + $0x4] sm:$0xf]
    %v195 = vld [vmem:[%s3 + $0x8] sm:$0xf]
    %v196 = vld [vmem:[%s3 + $0xc] sm:$0xf]
    %v197 = vld [vmem:[%s3 + $0x10] sm:$0xf]
    %v198 = vld [vmem:[%s3 + $0x14] sm:$0xf]
    %v199 = vld [vmem:[%s3 + $0x18] sm:$0xf]
    %v200 = vld [vmem:[%s3 + $0x1c] sm:$0xf]
    %v201 = vld [vmem:[%s3 + $0x20] sm:$0xf]
    %v202 = vld [vmem:[%s3 + $0x24] sm:$0xf]
    %v203 = vld [vmem:[%s3 + $0x28] sm:$0xf]
    %v204 = vld [vmem:[%s3 + $0x2c] sm:$0xf]
    %v205 = vld [vmem:[%s3 + $0x30] sm:$0xf]
    %v206 = vld [vmem:[%s3 + $0x34] sm:$0xf]
    %v207 = vld [vmem:[%s3 + $0x38] sm:$0xf]
    %v208 = vld [vmem:[%s3 + $0x3c] sm:$0xf]
    %v209 = vld [vmem:[%s4] sm:$0x1]
    %v211 = vlaneseq
    %v212 = vshrl.u32 %v211, 7
    %v213 = vsub.s32 0, %v212
    %v214 = vrot.slane %v209, %v213
    %v232 = vunpack.c.l.b16 %v193
    %v233 = vunpack.c.l.b16 %v194
    %v234 = vunpack.c.l.b16 %v195
    %v235 = vunpack.c.l.b16 %v196
    %v236 = vunpack.c.l.b16 %v197
    %v237 = vunpack.c.l.b16 %v198
    %v238 = vunpack.c.l.b16 %v199
    %v239 = vunpack.c.l.b16 %v200
    %v240 = vunpack.c.l.b16 %v201
    %v241 = vunpack.c.l.b16 %v202
    %v242 = vunpack.c.l.b16 %v203
    %v243 = vunpack.c.l.b16 %v204
    %v244 = vunpack.c.l.b16 %v205
    %v245 = vunpack.c.l.b16 %v206
    %v246 = vunpack.c.l.b16 %v207
    %v247 = vunpack.c.l.b16 %v208
    %v248 = vpack.c.b16 %v233, %v232
    %v249 = vpack.c.b16 %v235, %v234
    %v250 = vpack.c.b16 %v237, %v236
    %v251 = vpack.c.b16 %v239, %v238
    %v252 = vpack.c.b16 %v241, %v240
    %v253 = vpack.c.b16 %v243, %v242
    %v254 = vpack.c.b16 %v245, %v244
    %v255 = vpack.c.b16 %v247, %v246
    %264 = vmatprep.subr.bf16.mxu0 0
    %265 = vmatpush1.bf16.msra.mxu0 %v248
    %266 = vmatprep.subr.bf16.mxu0 0
    %267 = vmatpush1.bf16.msra.mxu0 %v249
    %268 = vmatprep.subr.bf16.mxu0 0
    %269 = vmatpush1.bf16.msra.mxu0 %v250
    %270 = vmatprep.subr.bf16.mxu0 0
    %271 = vmatpush1.bf16.msra.mxu0 %v251
    %272 = vmatprep.subr.bf16.mxu0 0
    %273 = vmatpush1.bf16.msra.mxu0 %v252
    %274 = vmatprep.subr.bf16.mxu0 0
    %275 = vmatpush1.bf16.msra.mxu0 %v253
    %276 = vmatprep.subr.bf16.mxu0 0
    %277 = vmatpush1.bf16.msra.mxu0 %v254
    %278 = vmatprep.subr.bf16.mxu0 0
    %279 = vmatpush1.bf16.msra.mxu0 %v255
    %280 = vmatprep.subr.bf16.mxu0 0
    %281 = vmatpush1.bf16.msra.mxu0 0
    %282 = vmatprep.subr.bf16.mxu0 0
    %283 = vmatpush1.bf16.msra.mxu0 0
    %284 = vmatprep.subr.bf16.mxu0 0
    %285 = vmatpush1.bf16.msra.mxu0 0
    %286 = vmatprep.subr.bf16.mxu0 0
    %287 = vmatpush1.bf16.msra.mxu0 0
    %288 = vmatprep.subr.bf16.mxu0 0
    %289 = vmatpush1.bf16.msra.mxu0 0
    %290 = vmatprep.subr.bf16.mxu0 0
    %291 = vmatpush1.bf16.msra.mxu0 0
    %292 = vmatprep.subr.bf16.mxu0 0
    %293 = vmatpush1.bf16.msra.mxu0 0
    %294 = vmatprep.subr.bf16.mxu0 0
    %295 = vmatpush1.bf16.msra.mxu0 0
    %296 = vmatprep.mubr.bf16.mxu0 0
    %297 = vmatmul.mubr.bf16.gmra.mrb[0].mxu0 %v191
    %v298 = vpop.f32.mrb[0].mxu0
    %v299 = vadd.f32 %v214, %v298
    %v300 = vpop.f32.mrb[0].mxu0
    %v301 = vpop.f32.mrb[0].mxu0
    %v302 = vadd.f32 %v214, %v301
    %v303 = vpop.f32.mrb[0].mxu0
    %304 = vmatprep.mubr.bf16.mxu0 0
    %305 = vmatmul.mubr.bf16.gmra.mrb[0].mxu0 %v192
    %v306 = vpop.f32.mrb[0].mxu0
    %v307 = vadd.f32 %v214, %v306
    %v308 = vpop.f32.mrb[0].mxu0
    %v309 = vpop.f32.mrb[0].mxu0
    %v310 = vadd.f32 %v214, %v309
    %v311 = vpop.f32.mrb[0].mxu0
    %312 = vdwg.mxu0
    %v313 = vmax.f32 %v299, 0.0
    %v314 = vmax.f32 %v302, 0.0
    %v315 = vmax.f32 %v307, 0.0
    %v316 = vmax.f32 %v310, 0.0
    %v317 = vpack.c.bf16 %v314, %v313
    %v318 = vpack.c.bf16 %v316, %v315
    %v319 = vld [vmem:[#allocation7] sm:$0xf]
    %v320 = vld [vmem:[#allocation7 + $0x4] sm:$0xf]
    %v321 = vld [vmem:[#allocation7 + $0x8] sm:$0xf]
    %v322 = vld [vmem:[#allocation7 + $0xc] sm:$0xf]
    %v323 = vld [vmem:[#allocation7 + $0x10] sm:$0xf]
    %v324 = vld [vmem:[#allocation7 + $0x14] sm:$0xf]
    %v325 = vld [vmem:[#allocation7 + $0x18] sm:$0xf]
    %v326 = vld [vmem:[#allocation7 + $0x1c] sm:$0xf]
    %v327 = vld [vmem:[#allocation7 + $0x20] sm:$0xf]
    %v328 = vld [vmem:[#allocation7 + $0x24] sm:$0xf]
    %v329 = vld [vmem:[#allocation7 + $0x28] sm:$0xf]
    %v330 = vld [vmem:[#allocation7 + $0x2c] sm:$0xf]
    %v331 = vld [vmem:[#allocation7 + $0x30] sm:$0xf]
    %v332 = vld [vmem:[#allocation7 + $0x34] sm:$0xf]
    %v333 = vld [vmem:[#allocation7 + $0x38] sm:$0xf]
    %v334 = vld [vmem:[#allocation7 + $0x3c] sm:$0xf]
    %v335 = vld [vmem:[%s6] sm:$0x1]
    %v337 = vlaneseq
    %v338 = vshrl.u32 %v337, 7
    %v339 = vsub.s32 0, %v338
    %v340 = vrot.slane %v335, %v339
    %v358 = vunpack.c.l.b16 %v319
    %v359 = vunpack.c.l.b16 %v320
    %v360 = vunpack.c.l.b16 %v321
    %v361 = vunpack.c.l.b16 %v322
    %v362 = vunpack.c.l.b16 %v323
    %v363 = vunpack.c.l.b16 %v324
    %v364 = vunpack.c.l.b16 %v325
    %v365 = vunpack.c.l.b16 %v326
    %v366 = vunpack.c.l.b16 %v327
    %v367 = vunpack.c.l.b16 %v328
    %v368 = vunpack.c.l.b16 %v329
    %v369 = vunpack.c.l.b16 %v330
    %v370 = vunpack.c.l.b16 %v331
    %v371 = vunpack.c.l.b16 %v332
    %v372 = vunpack.c.l.b16 %v333
    %v373 = vunpack.c.l.b16 %v334
    %v374 = vpack.c.b16 %v359, %v358
    %v375 = vpack.c.b16 %v361, %v360
    %v376 = vpack.c.b16 %v363, %v362
    %v377 = vpack.c.b16 %v365, %v364
    %v378 = vpack.c.b16 %v367, %v366
    %v379 = vpack.c.b16 %v369, %v368
    %v380 = vpack.c.b16 %v371, %v370
    %v381 = vpack.c.b16 %v373, %v372
    %390 = vmatprep.subr.bf16.mxu0 0
    %391 = vmatpush1.bf16.msra.mxu0 %v374
    %392 = vmatprep.subr.bf16.mxu0 0
    %393 = vmatpush1.bf16.msra.mxu0 %v375
    %394 = vmatprep.subr.bf16.mxu0 0
    %395 = vmatpush1.bf16.msra.mxu0 %v376
    %396 = vmatprep.subr.bf16.mxu0 0
    %397 = vmatpush1.bf16.msra.mxu0 %v377
    %398 = vmatprep.subr.bf16.mxu0 0
    %399 = vmatpush1.bf16.msra.mxu0 %v378
    %400 = vmatprep.subr.bf16.mxu0 0
    %401 = vmatpush1.bf16.msra.mxu0 %v379
    %402 = vmatprep.subr.bf16.mxu0 0
    %403 = vmatpush1.bf16.msra.mxu0 %v380
    %404 = vmatprep.subr.bf16.mxu0 0
    %405 = vmatpush1.bf16.msra.mxu0 %v381
    %406 = vmatprep.subr.bf16.mxu0 0
    %407 = vmatpush1.bf16.msra.mxu0 0
    %408 = vmatprep.subr.bf16.mxu0 0
    %409 = vmatpush1.bf16.msra.mxu0 0
    %410 = vmatprep.subr.bf16.mxu0 0
    %411 = vmatpush1.bf16.msra.mxu0 0
    %412 = vmatprep.subr.bf16.mxu0 0
    %413 = vmatpush1.bf16.msra.mxu0 0
    %414 = vmatprep.subr.bf16.mxu0 0
    %415 = vmatpush1.bf16.msra.mxu0 0
    %416 = vmatprep.subr.bf16.mxu0 0
    %417 = vmatpush1.bf16.msra.mxu0 0
    %418 = vmatprep.subr.bf16.mxu0 0
    %419 = vmatpush1.bf16.msra.mxu0 0
    %420 = vmatprep.subr.bf16.mxu0 0
    %421 = vmatpush1.bf16.msra.mxu0 0
    %422 = vmatprep.mubr.bf16.mxu0 0
    %423 = vmatmul.mubr.bf16.gmra.mrb[0].mxu0 %v317
    %v424 = vpop.f32.mrb[0].mxu0
    %v425 = vadd.f32 %v340, %v424
    %v426 = vpop.f32.mrb[0].mxu0
    %v427 = vpop.f32.mrb[0].mxu0
    %v428 = vadd.f32 %v340, %v427
    %v429 = vpop.f32.mrb[0].mxu0
    %430 = vmatprep.mubr.bf16.mxu0 0
    %431 = vmatmul.mubr.bf16.gmra.mrb[0].mxu0 %v318
    %v432 = vpop.f32.mrb[0].mxu0
    %v433 = vadd.f32 %v340, %v432
    %v434 = vpop.f32.mrb[0].mxu0
    %v435 = vpop.f32.mrb[0].mxu0
    %v436 = vadd.f32 %v340, %v435
    %v437 = vpop.f32.mrb[0].mxu0
    %438 = vdwg.mxu0
    %439 = vmax.xlane.f32.xlu0 %v425
    %v440 = vpop.xlane.xlu0 %439
    %441 = vmax.xlane.f32.xlu0 %v428
    %v442 = vpop.xlane.xlu0 %441
    %443 = vmax.xlane.f32.xlu0 %v433
    %v444 = vpop.xlane.xlu0 %443
    %445 = vmax.xlane.f32.xlu0 %v436
    %v446 = vpop.xlane.xlu0 %445
    %v447 = vsub.f32 %v425, %v440
    %v448 = vsub.f32 %v428, %v442
    %v449 = vsub.f32 %v433, %v444
    %v450 = vsub.f32 %v436, %v446
    %v451 = vmul.f32 %v447, 1.442695
    %v452 = vpow.pop %v451
    %v453 = vmul.f32 %v448, 1.442695
    %v454 = vpow.pop %v453
    %v455 = vmul.f32 %v449, 1.442695
    %v456 = vpow.pop %v455
    %v457 = vmul.f32 %v450, 1.442695
    %v458 = vpow.pop %v457
    %459 = vadd.xlane.f32.xlu0 %v452
    %v460 = vpop.xlane.xlu0 %459
    %461 = vadd.xlane.f32.xlu0 %v454
    %v462 = vpop.xlane.xlu0 %461
    %463 = vadd.xlane.f32.xlu0 %v456
    %v464 = vpop.xlane.xlu0 %463
    %465 = vadd.xlane.f32.xlu0 %v458
    %v466 = vpop.xlane.xlu0 %465
    %v467 = vrcp.pop %v460
    %v468 = vrcp.pop %v462
    %v469 = vrcp.pop %v464
    %v470 = vrcp.pop %v466
    %v471 = vmul.f32 %v452, %v467
    %v472 = vmul.f32 %v454, %v468
    %v473 = vmul.f32 %v456, %v469
    %v474 = vmul.f32 %v458, %v470
    %v475 = vpack.c.bf16 %v472, %v471
    %v476 = vpack.c.bf16 %v474, %v473
    %v479 = vunpack.c.l.b16 %v475
    %v480 = vunpack.c.h.b16 %v475
    %v481 = vunpack.c.l.b16 %v476
    %v482 = vunpack.c.h.b16 %v476
    %v483 = vpack.c.b16 %v479, %v479
    %v484 = vpack.c.b16 %v480, %v480
    %v485 = vpack.c.b16 %v481, %v481
    %v486 = vpack.c.b16 %v482, %v482
    %491 = vst [vmem:[#allocation8] sm:$0xf] %v483
    %492 = vst [vmem:[#allocation8 + $0x4] sm:$0xf] %v484
    %493 = vst [vmem:[#allocation8 + $0x8] sm:$0xf] %v485
    %494 = vst [vmem:[#allocation8 + $0xc] sm:$0xf] %v486
    %v495 = vlog2.pop %v460
    %v496 = vmul.f32 %v495, 0.6931472
    %v497 = vlog2.pop %v462
    %v498 = vmul.f32 %v497, 0.6931472
    %v499 = vlog2.pop %v464
    %v500 = vmul.f32 %v499, 0.6931472
    %v501 = vlog2.pop %v466
    %v502 = vmul.f32 %v501, 0.6931472
    %v503 = vsub.f32 %v447, %v496
    %v504 = vsub.f32 %v448, %v498
    %v505 = vsub.f32 %v449, %v500
    %v506 = vsub.f32 %v450, %v502
    %v507 = vlaneseq
    %v508 = vand.u32 %v507, 127
    %v509 = vld [vmem:[%s7] sm:$0xff]
    %v510 = vld [vmem:[%s7 + $0x8] sm:$0xff]
    %v511 = vld [vmem:[%s7 + $0x10] sm:$0xff]
    %v512 = vld [vmem:[%s7 + $0x18] sm:$0xff]
    %513 = vset.pattern.permute.xlu0 0
    %514 = vperm.xlu0 %513, %v509
    %v515 = vpop.permute.xlu0 %514
    %516 = vset.pattern.permute.xlu0 0
    %517 = vperm.xlu0 %516, %v510
    %v518 = vpop.permute.xlu0 %517
    %519 = vset.pattern.permute.xlu0 0
    %520 = vperm.xlu0 %519, %v511
    %v521 = vpop.permute.xlu0 %520
    %522 = vset.pattern.permute.xlu0 0
    %523 = vperm.xlu0 %522, %v512
    %v524 = vpop.permute.xlu0 %523
    %vm525 = vcmp.eq.s32.totalorder %v508, %v515
    %vm526 = vcmp.eq.s32.totalorder %v508, %v518
    %vm527 = vcmp.eq.s32.totalorder %v508, %v521
    %vm528 = vcmp.eq.s32.totalorder %v508, %v524
    %v529 = vsel %vm525, %v503, 0.0
    %v530 = vsel %vm526, %v504, 0.0
    %v531 = vsel %vm527, %v505, 0.0
    %v532 = vsel %vm528, %v506, 0.0
    %v533 = vld [vmem:[%s8] sm:$0xff]
    %v534 = vld [vmem:[%s8 + $0x8] sm:$0xff]
    %v535 = vld [vmem:[%s8 + $0x10] sm:$0xff]
    %v536 = vld [vmem:[%s8 + $0x18] sm:$0xff]
    %538 = vset.pattern.permute.xlu0 0
    %539 = vperm.xlu0 %538, %v533
    %v540 = vpop.permute.xlu0 %539
    %543 = vset.pattern.permute.xlu0 0
    %544 = vperm.xlu0 %543, %v534
    %v545 = vpop.permute.xlu0 %544
    %548 = vset.pattern.permute.xlu0 0
    %549 = vperm.xlu0 %548, %v535
    %v550 = vpop.permute.xlu0 %549
    %553 = vset.pattern.permute.xlu0 0
    %554 = vperm.xlu0 %553, %v536
    %v555 = vpop.permute.xlu0 %554
    %v557 = vmul.f32 %v540, %v529
    %v558 = vmul.f32 %v545, %v530
    %v559 = vmul.f32 %v550, %v531
    %v560 = vmul.f32 %v555, %v532
    %v561 = vadd.f32 %v557, %v558
    %v562 = vadd.f32 %v561, %v559
    %v563 = vadd.f32 %v562, %v560
    %564 = vadd.xlane.f32.xlu0 %v563
    %v565 = vpop.xlane.xlu0 %564
    %v566 = vrot.slane %v565, 4
    %v567 = vadd.f32 %v565, %v566
    %v568 = vrot.slane %v567, 2
    %v569 = vadd.f32 %v567, %v568
    %v570 = vrot.slane %v569, 1
    %v571 = vadd.f32 %v569, %v570
    %s572 = vtos %v571
    %s573 = ssub.f32 0.0, %s572
    %vm574 = vcmask 7168
    %v575 = vsel %vm574, %v533, 0.0
    %v576 = vsel %vm574, %v534, 0.0
    %v577 = vadd.f32 %v575, %v576
    %v578 = vsel %vm574, %v535, 0.0
    %v579 = vadd.f32 %v577, %v578
    %v580 = vsel %vm574, %v536, 0.0
    %v581 = vadd.f32 %v579, %v580
    %582 = vadd.xlane.f32.xlu0 %v581
    %v583 = vpop.xlane.xlu0 %582
    %v584 = vrot.slane %v583, 4
    %v585 = vadd.f32 %v583, %v584
    %v586 = vrot.slane %v585, 2
    %v587 = vadd.f32 %v585, %v586
    %v588 = vrot.slane %v587, 1
    %v589 = vadd.f32 %v587, %v588
    %s590 = vtos %v589
    %vm591 = vcmp.eq.s32.totalorder %v508, 0
    %vm592 = vcmp.eq.s32.totalorder %v508, 1
    %v593 = vstv %s590
    %v594 = vsel %vm592, %v593, 0.0
    %v595 = vstv %s573
    %v596 = vsel %vm591, %v595, %v594
    %597 = vst [vmem:[#allocation9] sm:$0xff] %v596
    // Predicated region
    $region50: #{tpu_custom_call.1} parent=1 // pred_check
      _
    $region51: #{tpu_custom_call.1} parent=1 // pred_check_branch
      %599 = sbr.rel (0) target = $region53
    $region52: #{tpu_custom_call.1} parent=1 // pred_region
      %s601 = ssub.s32 256, 256
      %602 = vsyncadd [#allocation4], %s601
      %s603 = sshll.u32 [#allocation8], 4
      %s604 = int_to_ptr.vmem [resolvable:$true] %s603
      %609 = dma.vmem_to_hbm [thread:$0]  %s604, 256, %s9, [#allocation4], 64, 64, 4
    $region53: #{tpu_custom_call.1} parent=1 // pred_fallthru
      _
    // Predicated region
    $region54: #{tpu_custom_call.1} parent=1 // pred_check
      _
    $region55: #{tpu_custom_call.1} parent=1 // pred_check_branch
      %611 = sbr.rel (0) target = $region57
    $region56: #{tpu_custom_call.1} parent=1 // pred_region
      %s613 = ssub.s32 128, 128
      %614 = vsyncadd [#allocation10], %s613
      %s616 = sshll.u32 [#allocation9], 4
      %s617 = int_to_ptr.vmem [resolvable:$true] %s616
      %619 = dma.vmem_to_hbm [thread:$0]  %s617, 128, %s10, [#allocation10]
    $region57: #{tpu_custom_call.1} parent=1 // pred_fallthru
      _
    // Predicated region
    $region58: #{tpu_custom_call.1} parent=1 // pred_check
      _
    $region59: #{tpu_custom_call.1} parent=1 // pred_check_branch
      %621 = sbr.rel (0) target = $region61
    $region60: #{tpu_custom_call.1} parent=1 // pred_region
      %622 = dma.done [#allocation4], 256
    $region61: #{tpu_custom_call.1} parent=1 // pred_fallthru
      _
    // Predicated region
    $region62: #{tpu_custom_call.1} parent=1 // pred_check
      _
    $region63: #{tpu_custom_call.1} parent=1 // pred_check_branch
      %624 = sbr.rel (0) target = $region65
    $region64: #{tpu_custom_call.1} parent=1 // pred_region
      %625 = dma.done [#allocation10], 128
    $region65: #{tpu_custom_call.1} parent=1 // pred_fallthru
      _
    %626 = vsyncpa [#allocation3], 1
    %627 = vsyncpa [#allocation6], 1
    %628 = vsyncpa [#allocation4], 1
    %629 = vsyncpa [#allocation10], 1

</llo_original>
